<compile_context>
chip_gen: v5e
topology: v5e:2x2
jax: 0.10.0
libtpu: 0.0.40
codegen_flags: <defaults>
</compile_context>

<pallas_src>
import jax
import jax.numpy as jnp
from jax.experimental import pallas as pl
from jax.experimental.pallas import tpu as pltpu

ACT_BIT = 5
PWR_COEF = float(2 ** ACT_BIT)          # 32.0
SCALE_COEF_INIT = 10.0                  # Parameter init: torch.ones(1) * 10.0

_LANES = 1024                           # lane-dense output width (multiple of 128)
_TARGET_BLOCK_BYTES = 2 * 1024 * 1024   # ~2 MiB per block; 4x (dbl-buf in+out) = 8 MiB VMEM


def _round_up(a, b):
    return ((a + b - 1) // b) * b


def _act_quant_kernel(scale_ref, x_ref, o_ref):
    # scale_ref: SMEM scalar parameter (shape (1,)), positive learned scale.
    scale = scale_ref[0]
    half = PWR_COEF - 0.5
    inv = half / scale          # scalar, computed once per block
    back = scale / half         # scalar

    x = x_ref[...].astype(jnp.float32)
    # relu + "0.5*(|out|-|out-scale|+scale)" identity == clamp(x, 0, scale)
    out = jnp.minimum(jnp.maximum(x, 0.0), scale)
    # RoundFn: round(out/scale * half)/half * scale, with the divide folded
    # into a precomputed reciprocal (<= 1 ulp difference pre-round).
    q = jnp.round(out * inv) * back
    o_ref[...] = q.astype(o_ref.dtype)


def act_quant(x, scale_coef):
    """x: any-shape float array (e.g. NCHW activations). scale_coef: shape (1,)."""
    orig_shape = x.shape
    orig_dtype = x.dtype
    flat = x.reshape(-1)
    n = flat.shape[0]

    itemsize = jnp.dtype(orig_dtype).itemsize
    # Sublane granularity for packed dtypes (f32: 8, bf16: 16, int8/fp8: 32).
    sub = {4: 8, 2: 16, 1: 32}.get(itemsize, 8)

    W = _LANES
    max_block_rows = max(sub, (_TARGET_BLOCK_BYTES // (W * itemsize)) // sub * sub)

    rows_needed = pl.cdiv(max(n, 1), W)
    rows_aligned = _round_up(rows_needed, sub)
    num_blocks = pl.cdiv(rows_aligned, max_block_rows)
    # Balance blocks so padding waste stays < one sublane-group per block.
    block_rows = _round_up(pl.cdiv(rows_aligned, num_blocks), sub)
    rows = num_blocks * block_rows
    n_pad = rows * W

    if n_pad != n:
        flat = jnp.pad(flat, (0, n_pad - n))
    x2d = flat.reshape(rows, W)

    cost = pl.CostEstimate(
        flops=4 * n_pad,
        transcendentals=0,
        bytes_accessed=2 * n_pad * itemsize,
    )

    out2d = pl.pallas_call(
        _act_quant_kernel,
        out_shape=jax.ShapeDtypeStruct((rows, W), orig_dtype),
        grid=(num_blocks,),
        in_specs=[
            pl.BlockSpec(memory_space=pltpu.SMEM),                    # scale (scalar)
            pl.BlockSpec((block_rows, W), lambda i: (i, 0)),          # x block
        ],
        out_specs=pl.BlockSpec((block_rows, W), lambda i: (i, 0)),
        compiler_params=pltpu.CompilerParams(
            dimension_semantics=("parallel",)),
        cost_estimate=cost,
    )(scale_coef.astype(jnp.float32), x2d)

    return out2d.reshape(-1)[:n].reshape(orig_shape)


def _reference(x, scale_coef):
    # Exact PyTorch formula (abs-based clamp + explicit divide).
    scale = scale_coef[0]
    out = jnp.maximum(x, 0.0)
    out = 0.5 * (jnp.abs(out) - jnp.abs(out - scale) + scale)
    half = PWR_COEF - 0.5
    return jnp.round(out / scale * half) / half * scale


if __name__ == "__main__":
    key = jax.random.PRNGKey(0)
    # NCHW activations, small shapes: batch=2, channels=4, spatial=16x16
    x = jax.random.normal(key, (2, 4, 16, 16), dtype=jnp.float32) * 12.0
    scale_coef = jnp.ones((1,), dtype=jnp.float32) * SCALE_COEF_INIT

    y = act_quant(x, scale_coef)
    jax.block_until_ready(y)

    y_ref = _reference(x, scale_coef)
    assert y.shape == x.shape and y.dtype == x.dtype
    assert jnp.allclose(y, y_ref, atol=1e-4, rtol=1e-5)

    print("KERNEL_OK")
</pallas_src>

<mosaic_0001>
module attributes {stable_mosaic.version = 11 : i64} {
  func.func @_act_quant_kernel(%arg0: i32, %arg1: memref<1xf32, #tpu.memory_space<smem>>, %arg2: memref<8x1024xf32, #tpu.memory_space<vmem>>, %arg3: memref<8x1024xf32, #tpu.memory_space<vmem>>) attributes {dimension_semantics = [#tpu.dimension_semantics<parallel>], iteration_bounds = array<i64: 1>, scalar_prefetch = 0 : i64, scratch_operands = 0 : i64, tpu.core_type = #tpu.core_type<tc>, window_params = [{transform_indices = @transform_0, window_bounds = array<i64: 1>}, {transform_indices = @transform_1, window_bounds = array<i64: 8, 1024>}, {transform_indices = @transform_2, window_bounds = array<i64: 8, 1024>}]} {
    %c0 = arith.constant 0 : index
    %0 = memref.load %arg1[%c0] : memref<1xf32, #tpu.memory_space<smem>>
    %cst = arith.constant 3.150000e+01 : f32
    %1 = arith.divf %cst, %0 : f32
    %cst_0 = arith.constant 3.150000e+01 : f32
    %2 = arith.divf %0, %cst_0 : f32
    %c0_1 = arith.constant 0 : index
    %c0_2 = arith.constant 0 : index
    %3 = vector.load %arg2[%c0_1, %c0_2] : memref<8x1024xf32, #tpu.memory_space<vmem>>, vector<8x1024xf32>
    %cst_3 = arith.constant 0.000000e+00 : f32
    %4 = vector.broadcast %cst_3 : f32 to vector<8x1024xf32>
    %5 = arith.maximumf %3, %4 : vector<8x1024xf32>
    %6 = vector.broadcast %0 : f32 to vector<8x1024xf32>
    %7 = arith.minimumf %5, %6 : vector<8x1024xf32>
    %8 = vector.broadcast %1 : f32 to vector<8x1024xf32>
    %9 = arith.mulf %7, %8 : vector<8x1024xf32>
    %10 = math.roundeven %9 : vector<8x1024xf32>
    %11 = vector.broadcast %2 : f32 to vector<8x1024xf32>
    %12 = arith.mulf %10, %11 : vector<8x1024xf32>
    %c0_4 = arith.constant 0 : index
    %c0_5 = arith.constant 0 : index
    %13 = vector.load %arg3[%c0_4, %c0_5] : memref<8x1024xf32, #tpu.memory_space<vmem>>, vector<8x1024xf32>
    tpu.vector_store %arg3[%c0_4, %c0_5], %12 {strides = array<i32>} : memref<8x1024xf32, #tpu.memory_space<vmem>>, vector<8x1024xf32>,
    return
  }
  func.func @transform_0(%arg0: i32) -> i32 {
    %c0_i32 = arith.constant 0 : i32
    %c0_i32_0 = arith.constant 0 : i32
    return %c0_i32 : i32
  }
  func.func @transform_1(%arg0: i32) -> (i32, i32) {
    %c0_i32 = arith.constant 0 : i32
    %c0_i32_0 = arith.constant 0 : i32
    return %arg0, %c0_i32 : i32, i32
  }
  func.func @transform_2(%arg0: i32) -> (i32, i32) {
    %c0_i32 = arith.constant 0 : i32
    %c0_i32_0 = arith.constant 0 : i32
    return %arg0, %c0_i32 : i32, i32
  }
}

</mosaic_0001>

<llo_original>
// kernel: tpu_custom_call.1
$region0: #{tpu_custom_call.1}
  #allocation0 [shape = 'u32[]', space=smem, size = 0x4, offset = 0x4, fixed_abs, tag = 'smem constant byte address 0x4 - core index']
  #allocation1 [shape = 'u32[72,128]{1,0:T(1,128)}', space=vmem, size = 0x9000, scoped, tag = 'internal scratch']
  #allocation2 [shape = 'f32[1]{0:T(128)S(6)}', space=smem, size = 0x200, scoped, tag = 'scoped memory for tpu_custom_call.1']
  %s0 = inlined_call_operand.<no memory space> [shape: f32[1], index: 0, kind: input, shape index: {}]
  %s1 = inlined_call_operand.hbm [shape: f32[8,1024], index: 1, kind: input, shape index: {}]
  %s2 = inlined_call_operand.hbm [shape: f32[8,1024], index: 2, kind: output, shape index: {}]
  %s3 = sld [smem:[#allocation0]]
  $region22: #{tpu_custom_call.1} parent=0
    _
  %s5 = ssub.s32 1, %s3
  %s6 = scalar_select 0, %s5, %s3
  %7 = sst [smem:[#allocation2]] %s0
  $region1: #{tpu_custom_call.1} parent=0
    #allocation3 [shape = 'u8[32768]{0}', space=vmem, size = 0x8000, scoped, tag = 'input window, operand 1, single buffered']
    #allocation4 [shape = 's32[1]{0}', space=sflag, size = 0x4, scoped, tag = 'scoped memory for tpu_custom_call.1']
    #allocation5 [shape = 's32[1]{0}', space=sflag, size = 0x4, scoped, tag = 'scoped memory for tpu_custom_call.1']
    #allocation6 [shape = 'u8[32768]{0}', space=vmem, size = 0x8000, scoped, tag = 'output window, operand 0, single buffered']
    %8 = vsyncpa [#allocation4], 0
    %9 = vsyncpa [#allocation5], 0
    // Predicated region
    $region2: #{tpu_custom_call.1} parent=1 // pred_check
      _
    $region3: #{tpu_custom_call.1} parent=1 // pred_check_branch
      %11 = sbr.rel (0) target = $region5
    $region4: #{tpu_custom_call.1} parent=1 // pred_region
      _
    $region5: #{tpu_custom_call.1} parent=1 // pred_fallthru
      _
    // Predicated region
    $region6: #{tpu_custom_call.1} parent=1 // pred_check
      _
    $region7: #{tpu_custom_call.1} parent=1 // pred_check_branch
      %13 = sbr.rel (0) target = $region9
    $region8: #{tpu_custom_call.1} parent=1 // pred_region
      %15 = vsyncadd [#allocation4], 0
      %s17 = sshll.u32 %s1, 4
      %s18 = int_to_ptr.hbm [resolvable:$true] %s17
      %s19 = sshll.u32 [#allocation3], 4
      %s20 = int_to_ptr.vmem [resolvable:$true] %s19
      %22 = dma.hbm_to_vmem [thread:$0]  %s18, 1024, %s20, [#allocation4]
    $region9: #{tpu_custom_call.1} parent=1 // pred_fallthru
      _
    // Predicated region
    $region10: #{tpu_custom_call.1} parent=1 // pred_check
      _
    $region11: #{tpu_custom_call.1} parent=1 // pred_check_branch
      %24 = sbr.rel (0) target = $region13
    $region12: #{tpu_custom_call.1} parent=1 // pred_region
      %26 = dma.done [#allocation4], 1024
    $region13: #{tpu_custom_call.1} parent=1 // pred_fallthru
      _
    %s27 = sld [smem:[#allocation2]]
    %v28 = vstv %s27
    %v29 = vrcp.pop %v28
    %v30 = vmul.f32 %v28, %v29
    %v31 = vsub.f32 1.0, %v30
    %v32 = vmul.f32 %v29, %v31
    %v33 = vadd.f32 %v29, %v32
    %vm34 = vweird.f32 %v28
    %vm35 = vweird.f32 %v29
    %vm36 = vmor %vm34, %vm35
    %v37 = vsel %vm36, %v29, %v33
    %v38 = vand.u32 2147483647, %v28
    %vm39 = vcmp.eq.f32.partialorder %v38, 8.507059e+37
    %v40 = vand.u32 %v28, 2147483648
    %v41 = vor.u32 1.1754944e-38, %v40
    %v42 = vsel %vm39, %v41, %v37
    %s43 = vtos %v42
    %s44 = smul.f32 31.5, %s43
    %v45 = vrcp.pop 31.5
    %v46 = vmul.f32 31.5, %v45
    %v47 = vsub.f32 1.0, %v46
    %v48 = vmul.f32 %v45, %v47
    %v49 = vadd.f32 %v45, %v48
    %vm50 = vweird.f32 %v45
    %v51 = vsel %vm50, %v45, %v49
    %s52 = vtos %v51
    %s53 = smul.f32 %s27, %s52
    %v54 = vld [vmem:[#allocation3] sm:$0xff]
    %v55 = vld [vmem:[#allocation3 + $0x8] sm:$0xff]
    %v56 = vld [vmem:[#allocation3 + $0x10] sm:$0xff]
    %v57 = vld [vmem:[#allocation3 + $0x18] sm:$0xff]
    %v58 = vld [vmem:[#allocation3 + $0x20] sm:$0xff]
    %v59 = vld [vmem:[#allocation3 + $0x28] sm:$0xff]
    %v60 = vld [vmem:[#allocation3 + $0x30] sm:$0xff]
    %v61 = vld [vmem:[#allocation3 + $0x38] sm:$0xff]
    %v62 = vmax.f32 %v54, 0.0
    %v63 = vmax.f32 %v55, 0.0
    %v64 = vmax.f32 %v56, 0.0
    %v65 = vmax.f32 %v57, 0.0
    %v66 = vmax.f32 %v58, 0.0
    %v67 = vmax.f32 %v59, 0.0
    %v68 = vmax.f32 %v60, 0.0
    %v69 = vmax.f32 %v61, 0.0
    %v70 = vstv %s27
    %v71 = vmin.f32 %v62, %v70
    %v72 = vmin.f32 %v63, %v70
    %v73 = vmin.f32 %v64, %v70
    %v74 = vmin.f32 %v65, %v70
    %v75 = vmin.f32 %v66, %v70
    %v76 = vmin.f32 %v67, %v70
    %v77 = vmin.f32 %v68, %v70
    %v78 = vmin.f32 %v69, %v70
    %v79 = vstv %s44
    %v80 = vmul.f32 %v71, %v79
    %v81 = vmul.f32 %v72, %v79
    %v82 = vmul.f32 %v73, %v79
    %v83 = vmul.f32 %v74, %v79
    %v84 = vmul.f32 %v75, %v79
    %v85 = vmul.f32 %v76, %v79
    %v86 = vmul.f32 %v77, %v79
    %v87 = vmul.f32 %v78, %v79
    %v88 = vround.ne.pseudo %v80
    %v89 = vround.ne.pseudo %v81
    %v90 = vround.ne.pseudo %v82
    %v91 = vround.ne.pseudo %v83
    %v92 = vround.ne.pseudo %v84
    %v93 = vround.ne.pseudo %v85
    %v94 = vround.ne.pseudo %v86
    %v95 = vround.ne.pseudo %v87
    %v96 = vstv %s53
    %v97 = vmul.f32 %v88, %v96
    %v98 = vmul.f32 %v89, %v96
    %v99 = vmul.f32 %v90, %v96
    %v100 = vmul.f32 %v91, %v96
    %v101 = vmul.f32 %v92, %v96
    %v102 = vmul.f32 %v93, %v96
    %v103 = vmul.f32 %v94, %v96
    %v104 = vmul.f32 %v95, %v96
    %105 = vst [vmem:[#allocation6] sm:$0xff] %v97
    %106 = vst [vmem:[#allocation6 + $0x8] sm:$0xff] %v98
    %107 = vst [vmem:[#allocation6 + $0x10] sm:$0xff] %v99
    %108 = vst [vmem:[#allocation6 + $0x18] sm:$0xff] %v100
    %109 = vst [vmem:[#allocation6 + $0x20] sm:$0xff] %v101
    %110 = vst [vmem:[#allocation6 + $0x28] sm:$0xff] %v102
    %111 = vst [vmem:[#allocation6 + $0x30] sm:$0xff] %v103
    %112 = vst [vmem:[#allocation6 + $0x38] sm:$0xff] %v104
    // Predicated region
    $region14: #{tpu_custom_call.1} parent=1 // pred_check
      _
    $region15: #{tpu_custom_call.1} parent=1 // pred_check_branch
      %114 = sbr.rel (0) target = $region17
    $region16: #{tpu_custom_call.1} parent=1 // pred_region
      %116 = vsyncadd [#allocation5], 0
      %s118 = sshll.u32 [#allocation6], 4
      %s119 = int_to_ptr.vmem [resolvable:$true] %s118
      %s120 = sshll.u32 %s2, 4
      %s121 = int_to_ptr.hbm [resolvable:$true] %s120
      %123 = dma.vmem_to_hbm [thread:$0]  %s119, 1024, %s121, [#allocation5]
    $region17: #{tpu_custom_call.1} parent=1 // pred_fallthru
      _
    // Predicated region
    $region18: #{tpu_custom_call.1} parent=1 // pred_check
      _
    $region19: #{tpu_custom_call.1} parent=1 // pred_check_branch
      %125 = sbr.rel (0) target = $region21
    $region20: #{tpu_custom_call.1} parent=1 // pred_region
      %127 = dma.done [#allocation5], 1024
    $region21: #{tpu_custom_call.1} parent=1 // pred_fallthru
      _
    %128 = vsyncpa [#allocation4], 1
    %129 = vsyncpa [#allocation5], 1

</llo_original>
